<compile_context>
chip_gen: v7x
topology: tpu7x:2x2x1
jax: 0.10.0
libtpu: 0.0.40
codegen_flags: <defaults>
</compile_context>

<pallas_src>
import jax
import jax.numpy as jnp
from jax.experimental import pallas as pl
from jax.experimental.pallas import tpu as pltpu


def _cdiv(a, b):
    return (a + b - 1) // b


def _round_up(x, m):
    return _cdiv(x, m) * m


def _ke_kernel(scalars_ref, h_ref, m_ref, o_ref):
    # scalars_ref (SMEM): [c (fused gate bias), rule_weight]
    c = scalars_ref[0]
    rule_w = scalars_ref[1]

    h = h_ref[...]                                            # (TM, width)
    # One lane-dense MXU matmul against the block-diagonal fused gate matrix.
    # bf16 operands (per review) -- hidden under the HBM stream on all gens.
    logit = jnp.dot(h.astype(jnp.bfloat16), m_ref[...],
                    preferred_element_type=jnp.float32) + c   # (TM, width)
    gate = 1.0 / (1.0 + jnp.exp(-logit))                      # exact sigmoid, f32
    delta = gate * rule_w
    o_ref[...] = (h.astype(jnp.float32) + delta).astype(o_ref.dtype)


def prepare_ke_params(params, in_dim):
    """Fold both linears into one matvec and build the lane-dense gate matrix.

    Call once per parameter set: hoists the tiny fusion ops and the 128x128
    matrix materialization out of the per-call path (review item).
    """
    W_w = params["W_w"].astype(jnp.float32)                   # (rule_dim, in_dim)
    W_b = params["W_b"].astype(jnp.float32)                   # (rule_dim,)
    g_w = params["gate_w"].astype(jnp.float32).reshape(-1)    # (rule_dim,)
    g_b = params["gate_b"].astype(jnp.float32).reshape(())
    r_w = params["rule_weights"].astype(jnp.float32).reshape(())

    v = g_w @ W_w                                             # (in_dim,)
    c = jnp.dot(g_w, W_b) + g_b                               # scalar
    scalars = jnp.stack([c, r_w])                             # -> SMEM

    # Lane packing: `pack` logical rows per 128-lane vreg row.
    if in_dim % 128 == 0:
        pack, feat = 1, in_dim
    elif 128 % in_dim == 0:
        pack, feat = 128 // in_dim, in_dim
    else:
        # Irregular in_dim: pad features to a 128-lane multiple so every store
        # stays full-width (avoids the masked vst.msk cliff). Costs one extra
        # pad/slice pass over H in the wrapper for such shapes.
        pack, feat = 1, _round_up(in_dim, 128)
        v = jnp.pad(v, (0, feat - in_dim))
    width = pack * feat

    # Block-diagonal fused gate matrix kron(I_pack, v * 1^T): each lane of a
    # row's group receives that logical row's logit.
    block = jnp.broadcast_to(v[:, None], (feat, feat))
    m_mat = jnp.kron(jnp.eye(pack, dtype=jnp.float32), block).astype(jnp.bfloat16)

    return {"scalars": scalars, "m_mat": m_mat,
            "in_dim": in_dim, "pack": pack, "feat": feat, "width": width}


def knowledge_enhancement_forward(H, rules, fused, *, tile_m=4096,
                                  alias_input=None):
    """H: [N, in_dim]; `rules` is accepted but unused (matches the PyTorch module).

    `fused` is the output of prepare_ke_params().  alias_input=None -> alias the
    packed input onto the output whenever the wrapper already materialized a
    fresh buffer; pass True if the caller donates H.
    """
    del rules  # unused by the reference forward pass
    N, in_dim = H.shape
    assert in_dim == fused["in_dim"]
    out_dtype = H.dtype
    pack, feat, width = fused["pack"], fused["feat"], fused["width"]
    itemsize = jnp.dtype(out_dtype).itemsize

    # --- pack logical rows into 128-lane rows, padding only what is needed ---
    padded = False
    Hp = H
    if feat != in_dim:                      # irregular in_dim -> feature pad
        Hp = jnp.pad(Hp, ((0, 0), (0, feat - in_dim)))
        padded = True
    row_pad = (-N) % pack
    if row_pad:                             # at most pack-1 rows
        Hp = jnp.pad(Hp, ((0, row_pad), (0, 0)))
        padded = True
    M = (N + row_pad) // pack
    H_packed = Hp.reshape(M, width)         # contiguous -> free reshape

    # --- tiling: big tiles, but keep >=4 grid steps when there is enough work
    sub = max(8, 32 // itemsize)            # sublane multiple for this dtype
    tile = min(tile_m, _round_up(M, sub))
    if M >= 4 * sub:
        tile = min(tile, max(sub, _round_up(_cdiv(M, 4), sub)))
    grid = (_cdiv(M, tile),)                # ragged last block handled by Pallas

    vmem_limit = int(4 * tile * width * itemsize      # in + out, double-buffered
                     + 2 * width * width * 2          # resident bf16 gate matrix
                     + (2 << 20))                     # headroom
    vmem_limit = max(vmem_limit, 8 << 20)

    cost = pl.CostEstimate(
        flops=2 * M * width * width,
        transcendentals=M * width,
        bytes_accessed=2 * M * width * itemsize + width * width * 2,
    )

    if alias_input is None:
        alias_input = padded                # fresh intermediate -> free to clobber
    io_aliases = {1: 0} if alias_input else {}

    out_packed = pl.pallas_call(
        _ke_kernel,
        out_shape=jax.ShapeDtypeStruct((M, width), out_dtype),
        grid=grid,
        in_specs=[
            pl.BlockSpec(memory_space=pltpu.MemorySpace.SMEM),   # [c, rule_weight]
            pl.BlockSpec((tile, width), lambda i: (i, 0)),       # packed H tile
            pl.BlockSpec((width, width), lambda i: (0, 0)),      # gate matrix (resident)
        ],
        out_specs=pl.BlockSpec((tile, width), lambda i: (i, 0)),
        input_output_aliases=io_aliases,
        cost_estimate=cost,
        compiler_params=pltpu.CompilerParams(
            dimension_semantics=("parallel",),
            vmem_limit_bytes=vmem_limit),
    )(fused["scalars"], H_packed, fused["m_mat"])

    out = out_packed.reshape(M * pack, feat)
    if feat != in_dim:
        out = out[:, :in_dim]
    if row_pad:
        out = out[:N]
    return out


if __name__ == "__main__":
    in_dim, rule_dim = 32, 16

    key = jax.random.PRNGKey(0)
    k_h, k_w, k_wb, k_gw, k_gb, k_rw, k_rules, k_h2, k_h3 = jax.random.split(key, 9)

    params = {
        "W_w": jax.random.normal(k_w, (rule_dim, in_dim), dtype=jnp.float32) * 0.1,
        "W_b": jax.random.normal(k_wb, (rule_dim,), dtype=jnp.float32) * 0.1,
        "gate_w": jax.random.normal(k_gw, (1, rule_dim), dtype=jnp.float32) * 0.1,
        "gate_b": jax.random.normal(k_gb, (1,), dtype=jnp.float32) * 0.1,
        "rule_weights": jax.random.uniform(k_rw, (1,), dtype=jnp.float32),
    }

    # Parameter fusion hoisted out of the per-call path (done once).
    fused = prepare_ke_params(params, in_dim)

    fwd = jax.jit(lambda H: knowledge_enhancement_forward(H, None, fused))

    def reference(H):
        rule_out = H @ params["W_w"].T + params["W_b"]
        gate = jax.nn.sigmoid(rule_out @ params["gate_w"].T + params["gate_b"])
        return H + gate * params["rule_weights"]

    # bf16 gate-logit MXU pass (perf review): the sigmoid gate is
    # saturation-tolerant, so a looser tolerance on the tiny additive delta.
    tol = dict(atol=2e-3, rtol=2e-3)

    # Case 1: small, evenly packed (N % 4 == 0): no pad, no trailing slice.
    N1 = 16
    H1 = jax.random.normal(k_h, (N1, in_dim), dtype=jnp.float32)
    rules1 = jax.random.normal(k_rules, (N1, rule_dim), dtype=jnp.float32)  # unused
    out1 = jax.block_until_ready(knowledge_enhancement_forward(H1, rules1, fused))
    assert out1.shape == (N1, in_dim)
    assert jnp.allclose(out1, reference(H1), **tol), "mismatch vs reference (N=16)"

    # Case 2: ragged row count (exercises the <=3-row pack pad + final slice).
    N2 = 19
    H2 = jax.random.normal(k_h2, (N2, in_dim), dtype=jnp.float32)
    out2 = jax.block_until_ready(fwd(H2))
    assert out2.shape == (N2, in_dim)
    assert jnp.allclose(out2, reference(H2), **tol), "mismatch vs reference (N=19)"

    # Case 3: multi-step grid with a partial last block (cdiv-grid path).
    N3 = 203
    H3 = jax.random.normal(k_h3, (N3, in_dim), dtype=jnp.float32)
    out3 = jax.block_until_ready(fwd(H3))
    assert out3.shape == (N3, in_dim)
    assert jnp.allclose(out3, reference(H3), **tol), "mismatch vs reference (N=203)"

    print("KERNEL_OK")
</pallas_src>

<mosaic_0001>
module attributes {stable_mosaic.version = 11 : i64} {
  func.func @_ke_kernel(%arg0: i32, %arg1: memref<2xf32, #tpu.memory_space<smem>>, %arg2: memref<8x128xf32, #tpu.memory_space<vmem>>, %arg3: memref<128x128xbf16, #tpu.memory_space<vmem>>, %arg4: memref<8x128xf32, #tpu.memory_space<vmem>>) attributes {dimension_semantics = [#tpu.dimension_semantics<parallel>], iteration_bounds = array<i64: 1>, scalar_prefetch = 0 : i64, scratch_operands = 0 : i64, tpu.core_type = #tpu.core_type<tc>, window_params = [{transform_indices = @transform_0, window_bounds = array<i64: 2>}, {transform_indices = @transform_1, window_bounds = array<i64: 8, 128>}, {pipeline_mode = #tpu.pipeline_mode<synchronous>, transform_indices = @transform_2, window_bounds = array<i64: 128, 128>}, {transform_indices = @transform_3, window_bounds = array<i64: 8, 128>}]} {
    %c0 = arith.constant 0 : index
    %0 = memref.load %arg1[%c0] : memref<2xf32, #tpu.memory_space<smem>>
    %c1 = arith.constant 1 : index
    %1 = memref.load %arg1[%c1] : memref<2xf32, #tpu.memory_space<smem>>
    %c0_0 = arith.constant 0 : index
    %c0_1 = arith.constant 0 : index
    %2 = vector.load %arg2[%c0_0, %c0_1] : memref<8x128xf32, #tpu.memory_space<vmem>>, vector<8x128xf32>
    %3 = arith.truncf %2 : vector<8x128xf32> to vector<8x128xbf16>
    %c0_2 = arith.constant 0 : index
    %c0_3 = arith.constant 0 : index
    %4 = vector.load %arg3[%c0_2, %c0_3] : memref<128x128xbf16, #tpu.memory_space<vmem>>, vector<128x128xbf16>
    %cst = arith.constant dense<0.000000e+00> : vector<8x128xf32>
    %5 = tpu.matmul %3, %4, %cst {dimension_numbers = #tpu.dot_dimension_numbers<[1], [0], [0], [1], [0, 0, 1, 1], [], []>} : vector<8x128xbf16>, vector<128x128xbf16>, vector<8x128xf32> -> vector<8x128xf32>
    %6 = vector.broadcast %0 : f32 to vector<8x128xf32>
    %7 = arith.addf %5, %6 : vector<8x128xf32>
    %cst_4 = arith.constant 0.000000e+00 : f32
    %8 = vector.broadcast %cst_4 : f32 to vector<8x128xf32>
    %9 = arith.subf %8, %7 : vector<8x128xf32>
    %10 = math.exp %9 : vector<8x128xf32>
    %cst_5 = arith.constant 1.000000e+00 : f32
    %11 = vector.broadcast %cst_5 : f32 to vector<8x128xf32>
    %12 = arith.addf %11, %10 : vector<8x128xf32>
    %cst_6 = arith.constant 1.000000e+00 : f32
    %13 = vector.broadcast %cst_6 : f32 to vector<8x128xf32>
    %14 = arith.divf %13, %12 : vector<8x128xf32>
    %15 = vector.broadcast %1 : f32 to vector<8x128xf32>
    %16 = arith.mulf %14, %15 : vector<8x128xf32>
    %17 = arith.addf %2, %16 : vector<8x128xf32>
    %c0_7 = arith.constant 0 : index
    %c0_8 = arith.constant 0 : index
    %18 = vector.load %arg4[%c0_7, %c0_8] : memref<8x128xf32, #tpu.memory_space<vmem>>, vector<8x128xf32>
    tpu.vector_store %arg4[%c0_7, %c0_8], %17 {strides = array<i32>} : memref<8x128xf32, #tpu.memory_space<vmem>>, vector<8x128xf32>,
    return
  }
  func.func @transform_0(%arg0: i32) -> i32 {
    %c0_i32 = arith.constant 0 : i32
    %c0_i32_0 = arith.constant 0 : i32
    return %c0_i32 : i32
  }
  func.func @transform_1(%arg0: i32) -> (i32, i32) {
    %c0_i32 = arith.constant 0 : i32
    %c0_i32_0 = arith.constant 0 : i32
    return %arg0, %c0_i32 : i32, i32
  }
  func.func @transform_2(%arg0: i32) -> (i32, i32) {
    %c0_i32 = arith.constant 0 : i32
    %c0_i32_0 = arith.constant 0 : i32
    %c0_i32_1 = arith.constant 0 : i32
    return %c0_i32, %c0_i32_0 : i32, i32
  }
  func.func @transform_3(%arg0: i32) -> (i32, i32) {
    %c0_i32 = arith.constant 0 : i32
    %c0_i32_0 = arith.constant 0 : i32
    return %arg0, %c0_i32 : i32, i32
  }
}

</mosaic_0001>

<llo_original>
// kernel: tpu_custom_call.1
$region0: #{tpu_custom_call.1}
  #allocation0 [shape = 'u32[]', space=smem, size = 0x4, offset = 0x4, fixed_abs, tag = 'smem constant byte address 0x4 - core index']
  #allocation1 [shape = 'u32[144,128]{1,0:T(1,128)}', space=vmem, size = 0x12000, scoped, tag = 'internal scratch']
  %s0 = inlined_call_operand.hbm [shape: f32[2], index: 0, kind: input, shape index: {}]
  %s1 = inlined_call_operand.hbm [shape: f32[4,128], index: 1, kind: input, shape index: {}]
  %s2 = inlined_call_operand.hbm [shape: bf16[128,128], index: 2, kind: input, shape index: {}]
  %s3 = inlined_call_operand.hbm [shape: f32[4,128], index: 3, kind: output, shape index: {}]
  %s4 = sld [smem:[#allocation0]]
  $region34: #{tpu_custom_call.1} parent=0
    _
  %s6 = ssub.s32 1, %s4
  %s7 = scalar_select 0, %s6, %s4
  $region1: #{tpu_custom_call.1} parent=0
    #allocation2 [shape = 'u8[512]{0}', space=smem, size = 0x200, scoped, tag = 'input window, operand 0, single buffered']
    #allocation3 [shape = 's32[1]{0}', space=sflag, size = 0x4, scoped, tag = 'scoped memory for tpu_custom_call.1']
    #allocation4 [shape = 's32[1]{0}', space=sflag, size = 0x4, scoped, tag = 'scoped memory for tpu_custom_call.1']
    #allocation5 [shape = 's32[1]{0}', space=sflag, size = 0x4, scoped, tag = 'scoped memory for tpu_custom_call.1']
    #allocation6 [shape = 'u8[4096]{0}', space=vmem, size = 0x1000, scoped, tag = 'input window, operand 1, single buffered']
    #allocation7 [shape = 'u8[32768]{0}', space=vmem, size = 0x8000, scoped, tag = 'input window, operand 2, single buffered']
    #allocation8 [shape = 's32[1]{0}', space=sflag, size = 0x4, scoped, tag = 'scoped memory for tpu_custom_call.1']
    #allocation9 [shape = 'u8[4096]{0}', space=vmem, size = 0x1000, scoped, tag = 'output window, operand 0, single buffered']
    %8 = vsyncpa [#allocation5], 0
    %9 = vsyncpa [#allocation3], 0
    %10 = vsyncpa [#allocation8], 0
    %11 = vsyncpa [#allocation4], 0
    // Predicated region
    $region2: #{tpu_custom_call.1} parent=1 // pred_check
      _
    $region3: #{tpu_custom_call.1} parent=1 // pred_check_branch
      %13 = sbr.rel (0) target = $region5
    $region4: #{tpu_custom_call.1} parent=1 // pred_region
      %s15 = ssub.s32 16, 16
      %16 = vsyncadd [#allocation5], %s15
      %19 = dma.hbm_to_smem %s0, 16, [#allocation2], [#allocation5]
    $region5: #{tpu_custom_call.1} parent=1 // pred_fallthru
      _
    // Predicated region
    $region6: #{tpu_custom_call.1} parent=1 // pred_check
      _
    $region7: #{tpu_custom_call.1} parent=1 // pred_check_branch
      %21 = sbr.rel (0) target = $region9
    $region8: #{tpu_custom_call.1} parent=1 // pred_region
      %s23 = ssub.s32 128, 64
      %24 = vsyncadd [#allocation3], %s23
      %s25 = sshll.u32 [#allocation6], 4
      %s26 = int_to_ptr.vmem [resolvable:$true] %s25
      %31 = dma.hbm_to_vmem [thread:$0]  %s1, 64, %s26, [#allocation3], 64, 64, 4
    $region9: #{tpu_custom_call.1} parent=1 // pred_fallthru
      _
    // Predicated region
    $region10: #{tpu_custom_call.1} parent=1 // pred_check
      _
    $region11: #{tpu_custom_call.1} parent=1 // pred_check_branch
      %33 = sbr.rel (0) target = $region13
    $region12: #{tpu_custom_call.1} parent=1 // pred_region
      %s35 = ssub.s32 1024, 1024
      %36 = vsyncadd [#allocation8], %s35
      %s37 = sshll.u32 [#allocation7], 4
      %s38 = int_to_ptr.vmem [resolvable:$true] %s37
      %43 = dma.hbm_to_vmem [thread:$0]  %s2, 1024, %s38, [#allocation8], 64, 64, 4
    $region13: #{tpu_custom_call.1} parent=1 // pred_fallthru
      _
    // Predicated region
    $region14: #{tpu_custom_call.1} parent=1 // pred_check
      _
    $region15: #{tpu_custom_call.1} parent=1 // pred_check_branch
      %45 = sbr.rel (0) target = $region17
    $region16: #{tpu_custom_call.1} parent=1 // pred_region
      %46 = dma.done [#allocation5], 16
    $region17: #{tpu_custom_call.1} parent=1 // pred_fallthru
      _
    // Predicated region
    $region18: #{tpu_custom_call.1} parent=1 // pred_check
      _
    $region19: #{tpu_custom_call.1} parent=1 // pred_check_branch
      %48 = sbr.rel (0) target = $region21
    $region20: #{tpu_custom_call.1} parent=1 // pred_region
      %49 = dma.done [#allocation3], 128
    $region21: #{tpu_custom_call.1} parent=1 // pred_fallthru
      _
    // Predicated region
    $region22: #{tpu_custom_call.1} parent=1 // pred_check
      _
    $region23: #{tpu_custom_call.1} parent=1 // pred_check_branch
      %51 = sbr.rel (0) target = $region25
    $region24: #{tpu_custom_call.1} parent=1 // pred_region
      %52 = dma.done [#allocation8], 1024
    $region25: #{tpu_custom_call.1} parent=1 // pred_fallthru
      _
    %53 = sfence
    %s55 = sld [smem:[#allocation2]]
    %s56 = sld [smem:[#allocation2 + $0x1]]
    %v57 = vld [vmem:[#allocation6] sm:$0xff]
    %v58 = vpack.c.bf16 %v57, %v57
    %v59 = vld [vmem:[#allocation7] sm:$0xf]
    %v60 = vld [vmem:[#allocation7 + $0x4] sm:$0xf]
    %v61 = vld [vmem:[#allocation7 + $0x8] sm:$0xf]
    %v62 = vld [vmem:[#allocation7 + $0xc] sm:$0xf]
    %v63 = vld [vmem:[#allocation7 + $0x10] sm:$0xf]
    %v64 = vld [vmem:[#allocation7 + $0x14] sm:$0xf]
    %v65 = vld [vmem:[#allocation7 + $0x18] sm:$0xf]
    %v66 = vld [vmem:[#allocation7 + $0x1c] sm:$0xf]
    %v67 = vld [vmem:[#allocation7 + $0x20] sm:$0xf]
    %v68 = vld [vmem:[#allocation7 + $0x24] sm:$0xf]
    %v69 = vld [vmem:[#allocation7 + $0x28] sm:$0xf]
    %v70 = vld [vmem:[#allocation7 + $0x2c] sm:$0xf]
    %v71 = vld [vmem:[#allocation7 + $0x30] sm:$0xf]
    %v72 = vld [vmem:[#allocation7 + $0x34] sm:$0xf]
    %v73 = vld [vmem:[#allocation7 + $0x38] sm:$0xf]
    %v74 = vld [vmem:[#allocation7 + $0x3c] sm:$0xf]
    %v75 = vstv %s55
    %v92 = vunpack.c.l.b16 %v59
    %v93 = vunpack.c.l.b16 %v60
    %v94 = vunpack.c.l.b16 %v61
    %v95 = vunpack.c.l.b16 %v62
    %v96 = vunpack.c.l.b16 %v63
    %v97 = vunpack.c.l.b16 %v64
    %v98 = vunpack.c.l.b16 %v65
    %v99 = vunpack.c.l.b16 %v66
    %v100 = vunpack.c.l.b16 %v67
    %v101 = vunpack.c.l.b16 %v68
    %v102 = vunpack.c.l.b16 %v69
    %v103 = vunpack.c.l.b16 %v70
    %v104 = vunpack.c.l.b16 %v71
    %v105 = vunpack.c.l.b16 %v72
    %v106 = vunpack.c.l.b16 %v73
    %v107 = vunpack.c.l.b16 %v74
    %v108 = vpack.c.b16 %v93, %v92
    %v109 = vpack.c.b16 %v95, %v94
    %v110 = vpack.c.b16 %v97, %v96
    %v111 = vpack.c.b16 %v99, %v98
    %v112 = vpack.c.b16 %v101, %v100
    %v113 = vpack.c.b16 %v103, %v102
    %v114 = vpack.c.b16 %v105, %v104
    %v115 = vpack.c.b16 %v107, %v106
    %124 = vmatprep.subr.bf16.mxu0 0
    %125 = vmatpush1.bf16.msra.mxu0 %v108
    %126 = vmatprep.subr.bf16.mxu0 0
    %127 = vmatpush1.bf16.msra.mxu0 %v109
    %128 = vmatprep.subr.bf16.mxu0 0
    %129 = vmatpush1.bf16.msra.mxu0 %v110
    %130 = vmatprep.subr.bf16.mxu0 0
    %131 = vmatpush1.bf16.msra.mxu0 %v111
    %132 = vmatprep.subr.bf16.mxu0 0
    %133 = vmatpush1.bf16.msra.mxu0 %v112
    %134 = vmatprep.subr.bf16.mxu0 0
    %135 = vmatpush1.bf16.msra.mxu0 %v113
    %136 = vmatprep.subr.bf16.mxu0 0
    %137 = vmatpush1.bf16.msra.mxu0 %v114
    %138 = vmatprep.subr.bf16.mxu0 0
    %139 = vmatpush1.bf16.msra.mxu0 %v115
    %140 = vmatprep.subr.bf16.mxu0 0
    %141 = vmatpush1.bf16.msra.mxu0 0
    %142 = vmatprep.subr.bf16.mxu0 0
    %143 = vmatpush1.bf16.msra.mxu0 0
    %144 = vmatprep.subr.bf16.mxu0 0
    %145 = vmatpush1.bf16.msra.mxu0 0
    %146 = vmatprep.subr.bf16.mxu0 0
    %147 = vmatpush1.bf16.msra.mxu0 0
    %148 = vmatprep.subr.bf16.mxu0 0
    %149 = vmatpush1.bf16.msra.mxu0 0
    %150 = vmatprep.subr.bf16.mxu0 0
    %151 = vmatpush1.bf16.msra.mxu0 0
    %152 = vmatprep.subr.bf16.mxu0 0
    %153 = vmatpush1.bf16.msra.mxu0 0
    %154 = vmatprep.subr.bf16.mxu0 0
    %155 = vmatpush1.bf16.msra.mxu0 0
    %156 = vmatprep.mubr.bf16.mxu0 0
    %157 = vmatmul.mubr.bf16.gmra.mrb[0].mxu0 %v58
    %v158 = vpop.f32.mrb[0].mxu0
    %v159 = vadd.f32 %v75, %v158
    %v160 = vpop.f32.mrb[0].mxu0
    %v161 = vpop.f32.mrb[0].mxu0
    %v162 = vpop.f32.mrb[0].mxu0
    %163 = vdwg.mxu0
    %v164 = vsub.f32 0.0, %v159
    %v165 = vmul.f32 %v164, 1.442695
    %v166 = vpow.pop %v165
    %v167 = vadd.f32 %v166, 1.0
    %v168 = vrcp.pop %v167
    %v169 = vmul.f32 1.0, %v168
    %v170 = vstv %s56
    %v171 = vmul.f32 %v169, %v170
    %v172 = vadd.f32 %v57, %v171
    %173 = vst [vmem:[#allocation9] sm:$0xff] %v172
    // Predicated region
    $region26: #{tpu_custom_call.1} parent=1 // pred_check
      _
    $region27: #{tpu_custom_call.1} parent=1 // pred_check_branch
      %175 = sbr.rel (0) target = $region29
    $region28: #{tpu_custom_call.1} parent=1 // pred_region
      %s177 = ssub.s32 128, 64
      %178 = vsyncadd [#allocation4], %s177
      %s179 = sshll.u32 [#allocation9], 4
      %s180 = int_to_ptr.vmem [resolvable:$true] %s179
      %185 = dma.vmem_to_hbm [thread:$0]  %s180, 64, %s3, [#allocation4], 64, 64, 4
    $region29: #{tpu_custom_call.1} parent=1 // pred_fallthru
      _
    // Predicated region
    $region30: #{tpu_custom_call.1} parent=1 // pred_check
      _
    $region31: #{tpu_custom_call.1} parent=1 // pred_check_branch
      %187 = sbr.rel (0) target = $region33
    $region32: #{tpu_custom_call.1} parent=1 // pred_region
      %188 = dma.done [#allocation4], 128
    $region33: #{tpu_custom_call.1} parent=1 // pred_fallthru
      _
    %189 = vsyncpa [#allocation3], 1
    %190 = vsyncpa [#allocation8], 1
    %191 = vsyncpa [#allocation4], 1
    %192 = vsyncpa [#allocation5], 1

</llo_original>
